<compile_context>
chip_gen: v7x
topology: tpu7x:2x2x1
jax: 0.10.0
libtpu: 0.0.40
codegen_flags: <defaults>
</compile_context>

<pallas_src>
import math
from typing import NamedTuple

import jax
import jax.numpy as jnp
from jax.experimental import pallas as pl
from jax.experimental.pallas import tpu as pltpu

# Padded-vocab bias value.  -1e30 keeps all intermediates finite in f32
# (exp underflows to exactly 0); intermediates are always f32 in these kernels.
_NEG_BIG = -1e30


def _round_up(a, b):
    return ((a + b - 1) // b) * b


# --------------------------------------------------------------------------- #
# Kernels
# --------------------------------------------------------------------------- #
def _fused_kernel(x_ref, wt_ref, b_ref, o_ref):
    # logits = x @ W^T + b  (MXU, f32 accumulation)
    logits = jnp.dot(x_ref[...], wt_ref[...],
                     preferred_element_type=jnp.float32)          # (tr, Vp)
    logits = logits + b_ref[...].astype(jnp.float32)              # (1, Vp) bcast
    # numerically-stable log_softmax over the lane (vocab) axis
    m = jnp.max(logits, axis=-1, keepdims=True)
    shifted = logits - m
    lse = jnp.log(jnp.sum(jnp.exp(shifted), axis=-1, keepdims=True))
    o_ref[...] = (shifted - lse).astype(o_ref.dtype)


def _tiled_kernel(x_ref, wt_ref, b_ref, logits_ref, m_ref, l_ref, m_sc, l_sc):
    # Online logsumexp over vocab tiles (vocab axis = grid axis 1, "arbitrary").
    j = pl.program_id(1)

    @pl.when(j == 0)
    def _():
        m_sc[...] = jnp.full(m_sc.shape, -jnp.inf, dtype=m_sc.dtype)
        l_sc[...] = jnp.zeros(l_sc.shape, dtype=l_sc.dtype)

    logits = jnp.dot(x_ref[...], wt_ref[...],
                     preferred_element_type=jnp.float32)          # (tr, tv)
    logits = logits + b_ref[...].astype(jnp.float32)
    logits_ref[...] = logits                                      # stash raw logits

    m_prev = m_sc[...]
    m_new = jnp.maximum(m_prev, jnp.max(logits, axis=-1, keepdims=True))
    l_sc[...] = (l_sc[...] * jnp.exp(m_prev - m_new)
                 + jnp.sum(jnp.exp(logits - m_new), axis=-1, keepdims=True))
    m_sc[...] = m_new

    @pl.when(j == pl.num_programs(1) - 1)
    def _():
        m_ref[...] = m_sc[...]
        l_ref[...] = l_sc[...]


# --------------------------------------------------------------------------- #
# Host-side helpers
# --------------------------------------------------------------------------- #
class GeneratorParams(NamedTuple):
    wt: jax.Array      # (d_model, Vp): transposed, lane-padded weight
    b2: jax.Array      # (1, Vp) f32: padded bias (pad columns = _NEG_BIG)
    vocab: int         # true vocab size V


def prepare_generator_params(weight, bias, *, lane_multiple=128, mxu_dtype=None):
    """One-time parameter prep (hoisted out of the per-call path).

    weight: (vocab, d_model), bias: (vocab,).  mxu_dtype optionally casts the
    weight (e.g. bf16 on v5e for ~4x MXU rate; accumulation stays f32).
    """
    V, D = weight.shape
    Vp = _round_up(V, lane_multiple)      # lane-dense output (unmasked stores)
    wt = weight.T                          # (D, V)
    if mxu_dtype is not None:
        wt = wt.astype(mxu_dtype)
    if Vp != V:
        wt = jnp.pad(wt, ((0, 0), (0, Vp - V)))
        b2 = jnp.pad(bias.astype(jnp.float32), (0, Vp - V),
                     constant_values=_NEG_BIG)
    else:
        b2 = bias.astype(jnp.float32)
    return GeneratorParams(wt=wt, b2=b2.reshape(1, Vp), vocab=V)


def _vmem_budget():
    """Generation-aware scoped-VMEM limit (bytes) and planning budget."""
    try:
        cap = int(pltpu.get_tpu_info().vmem_capacity_bytes)
    except Exception:
        cap = 64 * 1024 * 1024            # conservative (v7x-sized) fallback
    limit = (cap * 13) // 16              # ~104 MiB on 128 MiB parts, ~52 MiB on v7x
    budget = limit - 8 * 1024 * 1024      # headroom for compiler-internal scratch
    return budget, limit


def _pick_row_tile(rows, budget_left, per_row, sublane):
    tr = max(budget_left, 0) // max(per_row, 1)
    tr = min(max(tr, sublane), 1024)
    if tr >= 256:                         # keep the MXU fully fed (v6e/v7x 256x256)
        tr = (tr // 256) * 256
    elif tr >= 128:                       # v5e MXU is 128x128
        tr = 128
    else:
        tr = (tr // sublane) * sublane
    return max(sublane, min(tr, _round_up(rows, sublane)))


def _generator_fused(x2, params, rows, budget, vmem_limit, sublane, out_dtype,
                     single_buffer):
    wt, b2 = params.wt, params.b2
    D, Vp = wt.shape
    x_item = jnp.dtype(x2.dtype).itemsize
    wt_item = jnp.dtype(wt.dtype).itemsize

    n_wbuf = 1 if single_buffer else 2
    fixed = n_wbuf * (wt_item * D * Vp + 4 * Vp)            # resident weight + bias
    per_row = 2 * x_item * D + 2 * x_item * Vp + 4 * (D + 3 * Vp)
    tr = _pick_row_tile(rows, budget - fixed, per_row, sublane)

    resident_kwargs = dict(pipeline_mode=pl.Buffered(1)) if single_buffer else {}
    grid = (pl.cdiv(rows, tr),)           # ragged last block: Pallas masks writes

    return pl.pallas_call(
        _fused_kernel,
        out_shape=jax.ShapeDtypeStruct((rows, Vp), out_dtype),
        grid_spec=pltpu.PrefetchScalarGridSpec(
            num_scalar_prefetch=0,
            grid=grid,
            in_specs=[
                pl.BlockSpec((tr, D), lambda i: (i, 0)),                     # x rows
                pl.BlockSpec((D, Vp), lambda i: (0, 0), **resident_kwargs),  # W^T
                pl.BlockSpec((1, Vp), lambda i: (0, 0), **resident_kwargs),  # bias
            ],
            out_specs=pl.BlockSpec((tr, Vp), lambda i: (i, 0)),
        ),
        compiler_params=pltpu.CompilerParams(
            dimension_semantics=("parallel",),
            vmem_limit_bytes=vmem_limit,
        ),
    )(x2, wt, b2)


def _generator_tiled(x2, params, rows, budget, vmem_limit, sublane, out_dtype,
                     vocab_tile):
    wt, b2 = params.wt, params.b2
    D, Vp = wt.shape
    # vocab tile: a multiple of 128 that divides Vp and is <= vocab_tile
    nb = Vp // 128
    tvb = 1
    for cand in range(min(nb, max(1, vocab_tile // 128)), 0, -1):
        if nb % cand == 0:
            tvb = cand
            break
    tv = 128 * tvb

    x_item = jnp.dtype(x2.dtype).itemsize
    wt_item = jnp.dtype(wt.dtype).itemsize
    fixed = 2 * (wt_item * D * tv + 4 * tv)                 # weight/bias tiles (db)
    per_row = 2 * x_item * D + 2 * 4 * tv + 4 * 3 * tv + 2 * 4
    tr = _pick_row_tile(rows, budget - fixed, per_row, sublane)

    grid = (pl.cdiv(rows, tr), Vp // tv)
    logits, m, l = pl.pallas_call(
        _tiled_kernel,
        out_shape=(
            jax.ShapeDtypeStruct((rows, Vp), jnp.float32),  # raw logits
            jax.ShapeDtypeStruct((rows, 1), jnp.float32),   # running max
            jax.ShapeDtypeStruct((rows, 1), jnp.float32),   # running sum(exp)
        ),
        grid_spec=pltpu.PrefetchScalarGridSpec(
            num_scalar_prefetch=0,
            grid=grid,
            in_specs=[
                pl.BlockSpec((tr, D), lambda i, j: (i, 0)),
                pl.BlockSpec((D, tv), lambda i, j: (0, j)),
                pl.BlockSpec((1, tv), lambda i, j: (0, j)),
            ],
            out_specs=[
                pl.BlockSpec((tr, tv), lambda i, j: (i, j)),
                pl.BlockSpec((tr, 1), lambda i, j: (i, 0)),
                pl.BlockSpec((tr, 1), lambda i, j: (i, 0)),
            ],
            scratch_shapes=[
                pltpu.VMEM((tr, 1), jnp.float32),
                pltpu.VMEM((tr, 1), jnp.float32),
            ],
        ),
        compiler_params=pltpu.CompilerParams(
            dimension_semantics=("parallel", "arbitrary"),
            vmem_limit_bytes=vmem_limit,
        ),
    )(x2, wt, b2)

    lse = m + jnp.log(l)                                    # (rows, 1)
    V = params.vocab
    return (logits[:, :V] - lse).astype(out_dtype)


def generator(x, params, *, force_path=None, vocab_tile=1024):
    """log_softmax(x @ W^T + b, axis=-1) with params from prepare_generator_params.

    x: (..., d_model).  Returns (..., vocab) with x's dtype.
    force_path: None (auto), "fused", or "tiled".
    """
    orig_shape = x.shape
    D = orig_shape[-1]
    assert params.wt.shape[0] == D, "d_model mismatch between x and params"
    V = params.vocab
    Vp = params.wt.shape[1]
    out_dtype = x.dtype

    rows = math.prod(orig_shape[:-1])
    x2 = x.reshape(rows, D)
    if (params.wt.dtype != x2.dtype
            and jnp.dtype(params.wt.dtype).itemsize < jnp.dtype(x2.dtype).itemsize):
        x2 = x2.astype(params.wt.dtype)   # match reduced-precision MXU weights

    budget, vmem_limit = _vmem_budget()
    x_item = jnp.dtype(x2.dtype).itemsize
    wt_item = jnp.dtype(params.wt.dtype).itemsize
    sublane = max(8, 32 // x_item)        # 8 f32 / 16 bf16 / 32 int8

    # Dispatch: resident-weight fused kernel vs vocab-tiled online-logsumexp.
    fixed_fused = wt_item * D * Vp + 4 * Vp
    per_row_fused = 2 * x_item * (D + Vp) + 4 * (D + 3 * Vp)
    tr_fit = max(budget - fixed_fused, 0) // max(per_row_fused, 1)
    use_fused = tr_fit >= min(64, _round_up(rows, sublane))
    if force_path == "fused":
        use_fused = True
    elif force_path == "tiled":
        use_fused = False

    if use_fused:
        try:
            out = _generator_fused(x2, params, rows, budget, vmem_limit, sublane,
                                   out_dtype, single_buffer=True)
        except Exception:
            # Fallback for jax builds without pipeline_mode on pallas_call
            # BlockSpecs: default double-buffered resident weight.
            out = _generator_fused(x2, params, rows, budget, vmem_limit, sublane,
                                   out_dtype, single_buffer=False)
        out = out[:, :V]
    else:
        out = _generator_tiled(x2, params, rows, budget, vmem_limit, sublane,
                               out_dtype, vocab_tile)

    return out.reshape(*orig_shape[:-1], V)


# --------------------------------------------------------------------------- #
# Self-test
# --------------------------------------------------------------------------- #
if __name__ == "__main__":
    key = jax.random.PRNGKey(0)
    k_x, k_w, k_b, k_w2, k_b2 = jax.random.split(key, 5)

    batch, seq, d_model, vocab_size = 2, 8, 32, 100
    x = jax.random.normal(k_x, (batch, seq, d_model), dtype=jnp.float32)

    # nn.Linear-style deterministic init (uniform in +-1/sqrt(d_model))
    bound = 1.0 / math.sqrt(d_model)
    weight = jax.random.uniform(k_w, (vocab_size, d_model), jnp.float32,
                                minval=-bound, maxval=bound)
    bias = jax.random.uniform(k_b, (vocab_size,), jnp.float32,
                              minval=-bound, maxval=bound)

    params = prepare_generator_params(weight, bias)   # one-time prep (hoisted)
    y = generator(x, params)                          # fused (resident-weight) path
    jax.block_until_ready(y)

    ref = jax.nn.log_softmax(x @ weight.T + bias, axis=-1)
    assert y.shape == ref.shape, f"shape mismatch {y.shape} vs {ref.shape}"
    assert jnp.allclose(y, ref, atol=1e-4, rtol=1e-4), "fused path mismatch"

    # Exercise the vocab-tiled (large-vocab / v7x) path on a small multi-tile case.
    vocab2 = 384
    weight2 = jax.random.uniform(k_w2, (vocab2, d_model), jnp.float32,
                                 minval=-bound, maxval=bound)
    bias2 = jax.random.uniform(k_b2, (vocab2,), jnp.float32,
                               minval=-bound, maxval=bound)
    params2 = prepare_generator_params(weight2, bias2)
    y2 = generator(x, params2, force_path="tiled", vocab_tile=128)
    jax.block_until_ready(y2)
    ref2 = jax.nn.log_softmax(x @ weight2.T + bias2, axis=-1)
    assert y2.shape == ref2.shape, f"shape mismatch {y2.shape} vs {ref2.shape}"
    assert jnp.allclose(y2, ref2, atol=1e-4, rtol=1e-4), "tiled path mismatch"

    print("KERNEL_OK")
</pallas_src>

<mosaic_0001>
module attributes {stable_mosaic.version = 11 : i64} {
  func.func @_fused_kernel(%arg0: i32, %arg1: memref<16x32xf32, #tpu.memory_space<vmem>>, %arg2: memref<32x128xf32, #tpu.memory_space<vmem>>, %arg3: memref<1x128xf32, #tpu.memory_space<vmem>>, %arg4: memref<16x128xf32, #tpu.memory_space<vmem>>) attributes {dimension_semantics = [#tpu.dimension_semantics<parallel>], iteration_bounds = array<i64: 1>, scalar_prefetch = 0 : i64, scratch_operands = 0 : i64, tpu.core_type = #tpu.core_type<tc>, window_params = [{transform_indices = @transform_0, window_bounds = array<i64: 16, 32>}, {pipeline_mode = #tpu.pipeline_mode<synchronous>, transform_indices = @transform_1, window_bounds = array<i64: 32, 128>}, {pipeline_mode = #tpu.pipeline_mode<synchronous>, transform_indices = @transform_2, window_bounds = array<i64: 1, 128>}, {transform_indices = @transform_3, window_bounds = array<i64: 16, 128>}]} {
    %c0 = arith.constant 0 : index
    %c0_0 = arith.constant 0 : index
    %0 = vector.load %arg1[%c0, %c0_0] : memref<16x32xf32, #tpu.memory_space<vmem>>, vector<16x32xf32>
    %c0_1 = arith.constant 0 : index
    %c0_2 = arith.constant 0 : index
    %1 = vector.load %arg2[%c0_1, %c0_2] : memref<32x128xf32, #tpu.memory_space<vmem>>, vector<32x128xf32>
    %cst = arith.constant dense<0.000000e+00> : vector<16x128xf32>
    %2 = tpu.matmul %0, %1, %cst {dimension_numbers = #tpu.dot_dimension_numbers<[1], [0], [0], [1], [0, 0, 1, 1], [], []>} : vector<16x32xf32>, vector<32x128xf32>, vector<16x128xf32> -> vector<16x128xf32>
    %c0_3 = arith.constant 0 : index
    %c0_4 = arith.constant 0 : index
    %3 = vector.load %arg3[%c0_3, %c0_4] : memref<1x128xf32, #tpu.memory_space<vmem>>, vector<1x128xf32>
    %4 = vector.broadcast %3 : vector<1x128xf32> to vector<16x128xf32>
    %5 = arith.addf %2, %4 : vector<16x128xf32>
    %cst_5 = arith.constant dense<0xFF800000> : vector<16xf32>
    %6 = vector.multi_reduction <maximumf>, %5, %cst_5 [1] : vector<16x128xf32> to vector<16xf32>
    %7 = vector.shape_cast %6 : vector<16xf32> to vector<16x1xf32>
    %8 = vector.broadcast %7 : vector<16x1xf32> to vector<16x128xf32>
    %9 = arith.subf %5, %8 : vector<16x128xf32>
    %10 = math.exp %9 : vector<16x128xf32>
    %cst_6 = arith.constant dense<0.000000e+00> : vector<16xf32>
    %11 = vector.multi_reduction <add>, %10, %cst_6 [1] : vector<16x128xf32> to vector<16xf32>
    %12 = vector.shape_cast %11 : vector<16xf32> to vector<16x1xf32>
    %13 = math.log %12 : vector<16x1xf32>
    %14 = vector.broadcast %13 : vector<16x1xf32> to vector<16x128xf32>
    %15 = arith.subf %9, %14 : vector<16x128xf32>
    %c0_7 = arith.constant 0 : index
    %c0_8 = arith.constant 0 : index
    %16 = vector.load %arg4[%c0_7, %c0_8] : memref<16x128xf32, #tpu.memory_space<vmem>>, vector<16x128xf32>
    tpu.vector_store %arg4[%c0_7, %c0_8], %15 {strides = array<i32>} : memref<16x128xf32, #tpu.memory_space<vmem>>, vector<16x128xf32>,
    return
  }
  func.func @transform_0(%arg0: i32) -> (i32, i32) {
    %c0_i32 = arith.constant 0 : i32
    %c0_i32_0 = arith.constant 0 : i32
    return %arg0, %c0_i32 : i32, i32
  }
  func.func @transform_1(%arg0: i32) -> (i32, i32) {
    %c0_i32 = arith.constant 0 : i32
    %c0_i32_0 = arith.constant 0 : i32
    %c0_i32_1 = arith.constant 0 : i32
    return %c0_i32, %c0_i32_0 : i32, i32
  }
  func.func @transform_2(%arg0: i32) -> (i32, i32) {
    %c0_i32 = arith.constant 0 : i32
    %c0_i32_0 = arith.constant 0 : i32
    %c0_i32_1 = arith.constant 0 : i32
    return %c0_i32, %c0_i32_0 : i32, i32
  }
  func.func @transform_3(%arg0: i32) -> (i32, i32) {
    %c0_i32 = arith.constant 0 : i32
    %c0_i32_0 = arith.constant 0 : i32
    return %arg0, %c0_i32 : i32, i32
  }
}

module attributes {stable_mosaic.version = 11 : i64} {
  func.func @_fused_kernel(%arg0: i32, %arg1: memref<16x32xf32, #tpu.memory_space<vmem>>, %arg2: memref<32x128xf32, #tpu.memory_space<vmem>>, %arg3: memref<1x128xf32, #tpu.memory_space<vmem>>, %arg4: memref<16x128xf32, #tpu.memory_space<vmem>>) attributes {dimension_semantics = [#tpu.dimension_semantics<parallel>], iteration_bounds = array<i64: 1>, scalar_prefetch = 0 : i64, scratch_operands = 0 : i64, tpu.core_type = #tpu.core_type<tc>, window_params = [{transform_indices = @transform_0, window_bounds = array<i64: 16, 32>}, {pipeline_mode = #tpu.pipeline_mode<synchronous>, transform_indices = @transform_1, window_bounds = array<i64: 32, 128>}, {pipeline_mode = #tpu.pipeline_mode<synchronous>, transform_indices = @transform_2, window_bounds = array<i64: 1, 128>}, {transform_indices = @transform_3, window_bounds = array<i64: 16, 128>}]} {
    %c0 = arith.constant 0 : index
    %c0_0 = arith.constant 0 : index
    %0 = vector.load %arg1[%c0, %c0_0] : memref<16x32xf32, #tpu.memory_space<vmem>>, vector<16x32xf32>
    %c0_1 = arith.constant 0 : index
    %c0_2 = arith.constant 0 : index
    %1 = vector.load %arg2[%c0_1, %c0_2] : memref<32x128xf32, #tpu.memory_space<vmem>>, vector<32x128xf32>
    %cst = arith.constant dense<0.000000e+00> : vector<16x128xf32>
    %2 = tpu.matmul %0, %1, %cst {dimension_numbers = #tpu.dot_dimension_numbers<[1], [0], [0], [1], [0, 0, 1, 1], [], []>} : vector<16x32xf32>, vector<32x128xf32>, vector<16x128xf32> -> vector<16x128xf32>
    %c0_3 = arith.constant 0 : index
    %c0_4 = arith.constant 0 : index
    %3 = vector.load %arg3[%c0_3, %c0_4] : memref<1x128xf32, #tpu.memory_space<vmem>>, vector<1x128xf32>
    %4 = vector.broadcast %3 : vector<1x128xf32> to vector<16x128xf32>
    %5 = arith.addf %2, %4 : vector<16x128xf32>
    %cst_5 = arith.constant dense<0xFF800000> : vector<16xf32>
    %6 = vector.multi_reduction <maximumf>, %5, %cst_5 [1] : vector<16x128xf32> to vector<16xf32>
    %7 = vector.shape_cast %6 : vector<16xf32> to vector<16x1xf32>
    %8 = vector.broadcast %7 : vector<16x1xf32> to vector<16x128xf32>
    %9 = arith.subf %5, %8 : vector<16x128xf32>
    %10 = math.exp %9 : vector<16x128xf32>
    %cst_6 = arith.constant dense<0.000000e+00> : vector<16xf32>
    %11 = vector.multi_reduction <add>, %10, %cst_6 [1] : vector<16x128xf32> to vector<16xf32>
    %12 = vector.shape_cast %11 : vector<16xf32> to vector<16x1xf32>
    %13 = math.log %12 : vector<16x1xf32>
    %14 = vector.broadcast %13 : vector<16x1xf32> to vector<16x128xf32>
    %15 = arith.subf %9, %14 : vector<16x128xf32>
    %c0_7 = arith.constant 0 : index
    %c0_8 = arith.constant 0 : index
    %16 = vector.load %arg4[%c0_7, %c0_8] : memref<16x128xf32, #tpu.memory_space<vmem>>, vector<16x128xf32>
    tpu.vector_store %arg4[%c0_7, %c0_8], %15 {strides = array<i32>} : memref<16x128xf32, #tpu.memory_space<vmem>>, vector<16x128xf32>,
    return
  }
  func.func @transform_0(%arg0: i32) -> (i32, i32) {
    %c0_i32 = arith.constant 0 : i32
    %c0_i32_0 = arith.constant 0 : i32
    return %arg0, %c0_i32 : i32, i32
  }
  func.func @transform_1(%arg0: i32) -> (i32, i32) {
    %c0_i32 = arith.constant 0 : i32
    %c0_i32_0 = arith.constant 0 : i32
    %c0_i32_1 = arith.constant 0 : i32
    return %c0_i32, %c0_i32_0 : i32, i32
  }
  func.func @transform_2(%arg0: i32) -> (i32, i32) {
    %c0_i32 = arith.constant 0 : i32
    %c0_i32_0 = arith.constant 0 : i32
    %c0_i32_1 = arith.constant 0 : i32
    return %c0_i32, %c0_i32_0 : i32, i32
  }
  func.func @transform_3(%arg0: i32) -> (i32, i32) {
    %c0_i32 = arith.constant 0 : i32
    %c0_i32_0 = arith.constant 0 : i32
    return %arg0, %c0_i32 : i32, i32
  }
}

</mosaic_0001>

<llo_original>
// kernel: tpu_custom_call.1
$region0: #{tpu_custom_call.1}
  #allocation0 [shape = 'u32[]', space=smem, size = 0x4, offset = 0x4, fixed_abs, tag = 'smem constant byte address 0x4 - core index']
  #allocation1 [shape = 'u32[144,128]{1,0:T(1,128)}', space=vmem, size = 0x12000, scoped, tag = 'internal scratch']
  %s0 = inlined_call_operand.hbm [shape: f32[16,32], index: 0, kind: input, shape index: {}]
  %s1 = inlined_call_operand.hbm [shape: f32[32,128], index: 1, kind: input, shape index: {}]
  %s2 = inlined_call_operand.vmem [shape: f32[1,128], index: 2, kind: input, shape index: {}]
  %s3 = inlined_call_operand.hbm [shape: f32[16,128], index: 3, kind: output, shape index: {}]
  %s4 = sld [smem:[#allocation0]]
  $region30: #{tpu_custom_call.1} parent=0
    _
  %s6 = ssub.s32 1, %s4
  %s7 = scalar_select 0, %s6, %s4
  $region1: #{tpu_custom_call.1} parent=0
    #allocation2 [shape = 'u8[8192]{0}', space=vmem, size = 0x2000, scoped, tag = 'input window, operand 0, single buffered']
    #allocation3 [shape = 's32[1]{0}', space=sflag, size = 0x4, scoped, tag = 'scoped memory for tpu_custom_call.1']
    #allocation4 [shape = 's32[1]{0}', space=sflag, size = 0x4, scoped, tag = 'scoped memory for tpu_custom_call.1']
    #allocation5 [shape = 'u8[16384]{0}', space=vmem, size = 0x4000, scoped, tag = 'input window, operand 1, single buffered']
    #allocation6 [shape = 's32[1]{0}', space=sflag, size = 0x4, scoped, tag = 'scoped memory for tpu_custom_call.1']
    #allocation7 [shape = 'u8[8192]{0}', space=vmem, size = 0x2000, scoped, tag = 'output window, operand 0, single buffered']
    %8 = vsyncpa [#allocation3], 0
    %9 = vsyncpa [#allocation6], 0
    %10 = vsyncpa [#allocation4], 0
    // Predicated region
    $region2: #{tpu_custom_call.1} parent=1 // pred_check
      _
    $region3: #{tpu_custom_call.1} parent=1 // pred_check_branch
      %12 = sbr.rel (0) target = $region5
    $region4: #{tpu_custom_call.1} parent=1 // pred_region
      %s14 = ssub.s32 256, 256
      %15 = vsyncadd [#allocation3], %s14
      %s16 = sshll.u32 [#allocation2], 4
      %s17 = int_to_ptr.vmem [resolvable:$true] %s16
      %22 = dma.hbm_to_vmem [thread:$0]  %s0, 256, %s17, [#allocation3], 128, 128, 8
    $region5: #{tpu_custom_call.1} parent=1 // pred_fallthru
      _
    // Predicated region
    $region6: #{tpu_custom_call.1} parent=1 // pred_check
      _
    $region7: #{tpu_custom_call.1} parent=1 // pred_check_branch
      %24 = sbr.rel (0) target = $region9
    $region8: #{tpu_custom_call.1} parent=1 // pred_region
      %s26 = ssub.s32 512, 512
      %27 = vsyncadd [#allocation6], %s26
      %s28 = sshll.u32 [#allocation5], 4
      %s29 = int_to_ptr.vmem [resolvable:$true] %s28
      %34 = dma.hbm_to_vmem [thread:$0]  %s1, 512, %s29, [#allocation6], 128, 128, 8
    $region9: #{tpu_custom_call.1} parent=1 // pred_fallthru
      _
    // Predicated region
    $region10: #{tpu_custom_call.1} parent=1 // pred_check
      _
    $region11: #{tpu_custom_call.1} parent=1 // pred_check_branch
      %36 = sbr.rel (0) target = $region13
    $region12: #{tpu_custom_call.1} parent=1 // pred_region
      _
    $region13: #{tpu_custom_call.1} parent=1 // pred_fallthru
      _
    // Predicated region
    $region14: #{tpu_custom_call.1} parent=1 // pred_check
      _
    $region15: #{tpu_custom_call.1} parent=1 // pred_check_branch
      %38 = sbr.rel (0) target = $region17
    $region16: #{tpu_custom_call.1} parent=1 // pred_region
      %39 = dma.done [#allocation3], 256
    $region17: #{tpu_custom_call.1} parent=1 // pred_fallthru
      _
    // Predicated region
    $region18: #{tpu_custom_call.1} parent=1 // pred_check
      _
    $region19: #{tpu_custom_call.1} parent=1 // pred_check_branch
      %41 = sbr.rel (0) target = $region21
    $region20: #{tpu_custom_call.1} parent=1 // pred_region
      %42 = dma.done [#allocation6], 512
    $region21: #{tpu_custom_call.1} parent=1 // pred_fallthru
      _
    %v43 = vld [vmem:[#allocation2] sm:$0xff]
    %v44 = vld [vmem:[#allocation2 + $0x8] sm:$0xff]
    %v45 = vld [vmem:[#allocation5] sm:$0xff]
    %v46 = vld [vmem:[#allocation5 + $0x8] sm:$0xff]
    %v47 = vld [vmem:[#allocation5 + $0x10] sm:$0xff]
    %v48 = vld [vmem:[#allocation5 + $0x18] sm:$0xff]
    %v49 = vld [vmem:[%s2] sm:$0x1]
    %v51 = vlaneseq
    %v52 = vshrl.u32 %v51, 7
    %v53 = vsub.s32 0, %v52
    %v54 = vrot.slane %v49, %v53
    %vm56 = vcmask 261120
    %v58 = vsel %vm56, %v43, 0
    %v61 = vsel %vm56, %v44, 0
    %63 = vmatprep.subr.mxu0 0.0
    %64 = vmatpush1.msra.mxu0 %v45
    %65 = vmatprep.subr.mxu0 0.0
    %66 = vmatpush1.msra.mxu0 %v46
    %67 = vmatprep.subr.mxu0 0.0
    %68 = vmatpush1.msra.mxu0 %v47
    %69 = vmatprep.subr.mxu0 0.0
    %70 = vmatpush1.msra.mxu0 %v48
    %71 = vmatprep.subr.mxu0 0.0
    %72 = vmatpush1.msra.mxu0 0.0
    %73 = vmatprep.subr.mxu0 0.0
    %74 = vmatpush1.msra.mxu0 0.0
    %75 = vmatprep.subr.mxu0 0.0
    %76 = vmatpush1.msra.mxu0 0.0
    %77 = vmatprep.subr.mxu0 0.0
    %78 = vmatpush1.msra.mxu0 0.0
    %79 = vmatprep.subr.mxu0 0.0
    %80 = vmatpush1.msra.mxu0 0.0
    %81 = vmatprep.subr.mxu0 0.0
    %82 = vmatpush1.msra.mxu0 0.0
    %83 = vmatprep.subr.mxu0 0.0
    %84 = vmatpush1.msra.mxu0 0.0
    %85 = vmatprep.subr.mxu0 0.0
    %86 = vmatpush1.msra.mxu0 0.0
    %87 = vmatprep.subr.mxu0 0.0
    %88 = vmatpush1.msra.mxu0 0.0
    %89 = vmatprep.subr.mxu0 0.0
    %90 = vmatpush1.msra.mxu0 0.0
    %91 = vmatprep.subr.mxu0 0.0
    %92 = vmatpush1.msra.mxu0 0.0
    %93 = vmatprep.subr.mxu0 0.0
    %94 = vmatpush1.msra.mxu0 0.0
    %95 = vmatprep.subr.mxu0 0.0
    %96 = vmatpush1.msra.mxu0 0.0
    %97 = vmatprep.subr.mxu0 0.0
    %98 = vmatpush1.msra.mxu0 0.0
    %99 = vmatprep.subr.mxu0 0.0
    %100 = vmatpush1.msra.mxu0 0.0
    %101 = vmatprep.subr.mxu0 0.0
    %102 = vmatpush1.msra.mxu0 0.0
    %103 = vmatprep.subr.mxu0 0.0
    %104 = vmatpush1.msra.mxu0 0.0
    %105 = vmatprep.subr.mxu0 0.0
    %106 = vmatpush1.msra.mxu0 0.0
    %107 = vmatprep.subr.mxu0 0.0
    %108 = vmatpush1.msra.mxu0 0.0
    %109 = vmatprep.subr.mxu0 0.0
    %110 = vmatpush1.msra.mxu0 0.0
    %111 = vmatprep.subr.mxu0 0.0
    %112 = vmatpush1.msra.mxu0 0.0
    %113 = vmatprep.subr.mxu0 0.0
    %114 = vmatpush1.msra.mxu0 0.0
    %115 = vmatprep.subr.mxu0 0.0
    %116 = vmatpush1.msra.mxu0 0.0
    %117 = vmatprep.subr.mxu0 0.0
    %118 = vmatpush1.msra.mxu0 0.0
    %119 = vmatprep.subr.mxu0 0.0
    %120 = vmatpush1.msra.mxu0 0.0
    %121 = vmatprep.subr.mxu0 0.0
    %122 = vmatpush1.msra.mxu0 0.0
    %123 = vmatprep.subr.mxu0 0.0
    %124 = vmatpush1.msra.mxu0 0.0
    %125 = vmatprep.subr.mxu0 0.0
    %126 = vmatpush1.msra.mxu0 0.0
    %127 = vmatprep.mubr.f32.mxu0 0.0
    %128 = vmatmul.mubr.f32.gmra.mrb[0].mxu0 %v58
    %v129 = vpop.f32.mrb[0].mxu0
    %v130 = vadd.f32 %v54, %v129
    %v131 = vpop.f32.mrb[0].mxu0
    %132 = vmatprep.mubr.f32.mxu0 0.0
    %133 = vmatmul.mubr.f32.gmra.mrb[0].mxu0 %v61
    %v134 = vpop.f32.mrb[0].mxu0
    %v135 = vadd.f32 %v54, %v134
    %v136 = vpop.f32.mrb[0].mxu0
    %137 = vdwg.mxu0
    %138 = vmax.xlane.f32.xlu0 %v130
    %v139 = vpop.xlane.xlu0 %138
    %140 = vmax.xlane.f32.xlu0 %v135
    %v141 = vpop.xlane.xlu0 %140
    %v142 = vsub.f32 %v130, %v139
    %v143 = vsub.f32 %v135, %v141
    %v144 = vmul.f32 %v142, 1.442695
    %v145 = vpow.pop %v144
    %v146 = vmul.f32 %v143, 1.442695
    %v147 = vpow.pop %v146
    %148 = vadd.xlane.f32.xlu0 %v145
    %v149 = vpop.xlane.xlu0 %148
    %150 = vadd.xlane.f32.xlu0 %v147
    %v151 = vpop.xlane.xlu0 %150
    %v152 = vlog2.pop %v149
    %v153 = vmul.f32 %v152, 0.6931472
    %v154 = vlog2.pop %v151
    %v155 = vmul.f32 %v154, 0.6931472
    %v156 = vsub.f32 %v142, %v153
    %v157 = vsub.f32 %v143, %v155
    %158 = vst [vmem:[#allocation7] sm:$0xff] %v156
    %159 = vst [vmem:[#allocation7 + $0x8] sm:$0xff] %v157
    // Predicated region
    $region22: #{tpu_custom_call.1} parent=1 // pred_check
      _
    $region23: #{tpu_custom_call.1} parent=1 // pred_check_branch
      %161 = sbr.rel (0) target = $region25
    $region24: #{tpu_custom_call.1} parent=1 // pred_region
      %s163 = ssub.s32 256, 256
      %164 = vsyncadd [#allocation4], %s163
      %s165 = sshll.u32 [#allocation7], 4
      %s166 = int_to_ptr.vmem [resolvable:$true] %s165
      %171 = dma.vmem_to_hbm [thread:$0]  %s166, 256, %s3, [#allocation4], 128, 128, 8
    $region25: #{tpu_custom_call.1} parent=1 // pred_fallthru
      _
    // Predicated region
    $region26: #{tpu_custom_call.1} parent=1 // pred_check
      _
    $region27: #{tpu_custom_call.1} parent=1 // pred_check_branch
      %173 = sbr.rel (0) target = $region29
    $region28: #{tpu_custom_call.1} parent=1 // pred_region
      %174 = dma.done [#allocation4], 256
    $region29: #{tpu_custom_call.1} parent=1 // pred_fallthru
      _
    %175 = vsyncpa [#allocation3], 1
    %176 = vsyncpa [#allocation6], 1
    %177 = vsyncpa [#allocation4], 1

// kernel: tpu_custom_call.1
$region0: #{tpu_custom_call.1}
  #allocation0 [shape = 'u32[]', space=smem, size = 0x4, offset = 0x4, fixed_abs, tag = 'smem constant byte address 0x4 - core index']
  #allocation1 [shape = 'u32[144,128]{1,0:T(1,128)}', space=vmem, size = 0x12000, scoped, tag = 'internal scratch']
  %s0 = inlined_call_operand.hbm [shape: f32[16,32], index: 0, kind: input, shape index: {}]
  %s1 = inlined_call_operand.hbm [shape: f32[32,128], index: 1, kind: input, shape index: {}]
  %s2 = inlined_call_operand.vmem [shape: f32[1,128], index: 2, kind: input, shape index: {}]
  %s3 = inlined_call_operand.hbm [shape: f32[16,128], index: 3, kind: output, shape index: {}]
  %s4 = sld [smem:[#allocation0]]
  $region30: #{tpu_custom_call.1} parent=0
    _
  %s6 = ssub.s32 1, %s4
  %s7 = scalar_select 0, %s6, %s4
  $region1: #{tpu_custom_call.1} parent=0
    #allocation2 [shape = 'u8[8192]{0}', space=vmem, size = 0x2000, scoped, tag = 'input window, operand 0, single buffered']
    #allocation3 [shape = 's32[1]{0}', space=sflag, size = 0x4, scoped, tag = 'scoped memory for tpu_custom_call.1']
    #allocation4 [shape = 's32[1]{0}', space=sflag, size = 0x4, scoped, tag = 'scoped memory for tpu_custom_call.1']
    #allocation5 [shape = 'u8[16384]{0}', space=vmem, size = 0x4000, scoped, tag = 'input window, operand 1, single buffered']
    #allocation6 [shape = 's32[1]{0}', space=sflag, size = 0x4, scoped, tag = 'scoped memory for tpu_custom_call.1']
    #allocation7 [shape = 'u8[8192]{0}', space=vmem, size = 0x2000, scoped, tag = 'output window, operand 0, single buffered']
    %8 = vsyncpa [#allocation3], 0
    %9 = vsyncpa [#allocation6], 0
    %10 = vsyncpa [#allocation4], 0
    // Predicated region
    $region2: #{tpu_custom_call.1} parent=1 // pred_check
      _
    $region3: #{tpu_custom_call.1} parent=1 // pred_check_branch
      %12 = sbr.rel (0) target = $region5
    $region4: #{tpu_custom_call.1} parent=1 // pred_region
      %s14 = ssub.s32 256, 256
      %15 = vsyncadd [#allocation3], %s14
      %s16 = sshll.u32 [#allocation2], 4
      %s17 = int_to_ptr.vmem [resolvable:$true] %s16
      %22 = dma.hbm_to_vmem [thread:$0]  %s0, 256, %s17, [#allocation3], 128, 128, 8
    $region5: #{tpu_custom_call.1} parent=1 // pred_fallthru
      _
    // Predicated region
    $region6: #{tpu_custom_call.1} parent=1 // pred_check
      _
    $region7: #{tpu_custom_call.1} parent=1 // pred_check_branch
      %24 = sbr.rel (0) target = $region9
    $region8: #{tpu_custom_call.1} parent=1 // pred_region
      %s26 = ssub.s32 512, 512
      %27 = vsyncadd [#allocation6], %s26
      %s28 = sshll.u32 [#allocation5], 4
      %s29 = int_to_ptr.vmem [resolvable:$true] %s28
      %34 = dma.hbm_to_vmem [thread:$0]  %s1, 512, %s29, [#allocation6], 128, 128, 8
    $region9: #{tpu_custom_call.1} parent=1 // pred_fallthru
      _
    // Predicated region
    $region10: #{tpu_custom_call.1} parent=1 // pred_check
      _
    $region11: #{tpu_custom_call.1} parent=1 // pred_check_branch
      %36 = sbr.rel (0) target = $region13
    $region12: #{tpu_custom_call.1} parent=1 // pred_region
      _
    $region13: #{tpu_custom_call.1} parent=1 // pred_fallthru
      _
    // Predicated region
    $region14: #{tpu_custom_call.1} parent=1 // pred_check
      _
    $region15: #{tpu_custom_call.1} parent=1 // pred_check_branch
      %38 = sbr.rel (0) target = $region17
    $region16: #{tpu_custom_call.1} parent=1 // pred_region
      %39 = dma.done [#allocation3], 256
    $region17: #{tpu_custom_call.1} parent=1 // pred_fallthru
      _
    // Predicated region
    $region18: #{tpu_custom_call.1} parent=1 // pred_check
      _
    $region19: #{tpu_custom_call.1} parent=1 // pred_check_branch
      %41 = sbr.rel (0) target = $region21
    $region20: #{tpu_custom_call.1} parent=1 // pred_region
      %42 = dma.done [#allocation6], 512
    $region21: #{tpu_custom_call.1} parent=1 // pred_fallthru
      _
    %v43 = vld [vmem:[#allocation2] sm:$0xff]
    %v44 = vld [vmem:[#allocation2 + $0x8] sm:$0xff]
    %v45 = vld [vmem:[#allocation5] sm:$0xff]
    %v46 = vld [vmem:[#allocation5 + $0x8] sm:$0xff]
    %v47 = vld [vmem:[#allocation5 + $0x10] sm:$0xff]
    %v48 = vld [vmem:[#allocation5 + $0x18] sm:$0xff]
    %v49 = vld [vmem:[%s2] sm:$0x1]
    %v51 = vlaneseq
    %v52 = vshrl.u32 %v51, 7
    %v53 = vsub.s32 0, %v52
    %v54 = vrot.slane %v49, %v53
    %vm56 = vcmask 261120
    %v58 = vsel %vm56, %v43, 0
    %v61 = vsel %vm56, %v44, 0
    %63 = vmatprep.subr.mxu0 0.0
    %64 = vmatpush1.msra.mxu0 %v45
    %65 = vmatprep.subr.mxu0 0.0
    %66 = vmatpush1.msra.mxu0 %v46
    %67 = vmatprep.subr.mxu0 0.0
    %68 = vmatpush1.msra.mxu0 %v47
    %69 = vmatprep.subr.mxu0 0.0
    %70 = vmatpush1.msra.mxu0 %v48
    %71 = vmatprep.subr.mxu0 0.0
    %72 = vmatpush1.msra.mxu0 0.0
    %73 = vmatprep.subr.mxu0 0.0
    %74 = vmatpush1.msra.mxu0 0.0
    %75 = vmatprep.subr.mxu0 0.0
    %76 = vmatpush1.msra.mxu0 0.0
    %77 = vmatprep.subr.mxu0 0.0
    %78 = vmatpush1.msra.mxu0 0.0
    %79 = vmatprep.subr.mxu0 0.0
    %80 = vmatpush1.msra.mxu0 0.0
    %81 = vmatprep.subr.mxu0 0.0
    %82 = vmatpush1.msra.mxu0 0.0
    %83 = vmatprep.subr.mxu0 0.0
    %84 = vmatpush1.msra.mxu0 0.0
    %85 = vmatprep.subr.mxu0 0.0
    %86 = vmatpush1.msra.mxu0 0.0
    %87 = vmatprep.subr.mxu0 0.0
    %88 = vmatpush1.msra.mxu0 0.0
    %89 = vmatprep.subr.mxu0 0.0
    %90 = vmatpush1.msra.mxu0 0.0
    %91 = vmatprep.subr.mxu0 0.0
    %92 = vmatpush1.msra.mxu0 0.0
    %93 = vmatprep.subr.mxu0 0.0
    %94 = vmatpush1.msra.mxu0 0.0
    %95 = vmatprep.subr.mxu0 0.0
    %96 = vmatpush1.msra.mxu0 0.0
    %97 = vmatprep.subr.mxu0 0.0
    %98 = vmatpush1.msra.mxu0 0.0
    %99 = vmatprep.subr.mxu0 0.0
    %100 = vmatpush1.msra.mxu0 0.0
    %101 = vmatprep.subr.mxu0 0.0
    %102 = vmatpush1.msra.mxu0 0.0
    %103 = vmatprep.subr.mxu0 0.0
    %104 = vmatpush1.msra.mxu0 0.0
    %105 = vmatprep.subr.mxu0 0.0
    %106 = vmatpush1.msra.mxu0 0.0
    %107 = vmatprep.subr.mxu0 0.0
    %108 = vmatpush1.msra.mxu0 0.0
    %109 = vmatprep.subr.mxu0 0.0
    %110 = vmatpush1.msra.mxu0 0.0
    %111 = vmatprep.subr.mxu0 0.0
    %112 = vmatpush1.msra.mxu0 0.0
    %113 = vmatprep.subr.mxu0 0.0
    %114 = vmatpush1.msra.mxu0 0.0
    %115 = vmatprep.subr.mxu0 0.0
    %116 = vmatpush1.msra.mxu0 0.0
    %117 = vmatprep.subr.mxu0 0.0
    %118 = vmatpush1.msra.mxu0 0.0
    %119 = vmatprep.subr.mxu0 0.0
    %120 = vmatpush1.msra.mxu0 0.0
    %121 = vmatprep.subr.mxu0 0.0
    %122 = vmatpush1.msra.mxu0 0.0
    %123 = vmatprep.subr.mxu0 0.0
    %124 = vmatpush1.msra.mxu0 0.0
    %125 = vmatprep.subr.mxu0 0.0
    %126 = vmatpush1.msra.mxu0 0.0
    %127 = vmatprep.mubr.f32.mxu0 0.0
    %128 = vmatmul.mubr.f32.gmra.mrb[0].mxu0 %v58
    %v129 = vpop.f32.mrb[0].mxu0
    %v130 = vadd.f32 %v54, %v129
    %v131 = vpop.f32.mrb[0].mxu0
    %132 = vmatprep.mubr.f32.mxu0 0.0
    %133 = vmatmul.mubr.f32.gmra.mrb[0].mxu0 %v61
    %v134 = vpop.f32.mrb[0].mxu0
    %v135 = vadd.f32 %v54, %v134
    %v136 = vpop.f32.mrb[0].mxu0
    %137 = vdwg.mxu0
    %138 = vmax.xlane.f32.xlu0 %v130
    %v139 = vpop.xlane.xlu0 %138
    %140 = vmax.xlane.f32.xlu0 %v135
    %v141 = vpop.xlane.xlu0 %140
    %v142 = vsub.f32 %v130, %v139
    %v143 = vsub.f32 %v135, %v141
    %v144 = vmul.f32 %v142, 1.442695
    %v145 = vpow.pop %v144
    %v146 = vmul.f32 %v143, 1.442695
    %v147 = vpow.pop %v146
    %148 = vadd.xlane.f32.xlu0 %v145
    %v149 = vpop.xlane.xlu0 %148
    %150 = vadd.xlane.f32.xlu0 %v147
    %v151 = vpop.xlane.xlu0 %150
    %v152 = vlog2.pop %v149
    %v153 = vmul.f32 %v152, 0.6931472
    %v154 = vlog2.pop %v151
    %v155 = vmul.f32 %v154, 0.6931472
    %v156 = vsub.f32 %v142, %v153
    %v157 = vsub.f32 %v143, %v155
    %158 = vst [vmem:[#allocation7] sm:$0xff] %v156
    %159 = vst [vmem:[#allocation7 + $0x8] sm:$0xff] %v157
    // Predicated region
    $region22: #{tpu_custom_call.1} parent=1 // pred_check
      _
    $region23: #{tpu_custom_call.1} parent=1 // pred_check_branch
      %161 = sbr.rel (0) target = $region25
    $region24: #{tpu_custom_call.1} parent=1 // pred_region
      %s163 = ssub.s32 256, 256
      %164 = vsyncadd [#allocation4], %s163
      %s165 = sshll.u32 [#allocation7], 4
      %s166 = int_to_ptr.vmem [resolvable:$true] %s165
      %171 = dma.vmem_to_hbm [thread:$0]  %s166, 256, %s3, [#allocation4], 128, 128, 8
    $region25: #{tpu_custom_call.1} parent=1 // pred_fallthru
      _
    // Predicated region
    $region26: #{tpu_custom_call.1} parent=1 // pred_check
      _
    $region27: #{tpu_custom_call.1} parent=1 // pred_check_branch
      %173 = sbr.rel (0) target = $region29
    $region28: #{tpu_custom_call.1} parent=1 // pred_region
      %174 = dma.done [#allocation4], 256
    $region29: #{tpu_custom_call.1} parent=1 // pred_fallthru
      _
    %175 = vsyncpa [#allocation3], 1
    %176 = vsyncpa [#allocation6], 1
    %177 = vsyncpa [#allocation4], 1

</llo_original>
